<compile_context>
chip_gen: v7x
topology: tpu7x:2x2x1
jax: 0.10.0
libtpu: 0.0.40
codegen_flags: <defaults>
</compile_context>

<pallas_src>
import jax
import jax.numpy as jnp
from jax.experimental import pallas as pl
from jax.experimental.pallas import tpu as pltpu


def _round_up(n, m):
    return ((n + m - 1) // m) * m


def fcg_single_kernel(x_ref, w1_ref, b1_ref, w2_ref, b2_ref, out_ref):
    # Hidden layer: bf16 operands on the MXU, f32 accumulation.
    x = x_ref[...].astype(jnp.bfloat16)
    w1 = w1_ref[...].astype(jnp.bfloat16)
    h = jnp.dot(x, w1, preferred_element_type=jnp.float32)
    h = h + b1_ref[...].astype(jnp.float32)   # (TB, latent) + (1, latent)

    # Sigmoid = 1 / (1 + exp(-h)): exp on the EUP, approximate reciprocal also
    # on the EUP -> both ride the EUP slot instead of the VALU.
    s = pl.reciprocal(1.0 + jnp.exp(-h), approx=True)

    # Output layer: bf16 operands, f32 accumulation, f32 bias add.
    y = jnp.dot(s.astype(jnp.bfloat16), w2_ref[...].astype(jnp.bfloat16),
                preferred_element_type=jnp.float32)
    out_ref[...] = (y + b2_ref[...].astype(jnp.float32)).astype(out_ref.dtype)


def fcg_single_forward(x, w1, b1, w2, b2, *, block_batch=256):
    """x: (B, input_dim); w1: (input_dim, latent); b1: (1, latent);
       w2: (latent, output_dim); b2: (1, output_dim)  ->  (B, output_dim)."""
    B, in_dim = x.shape
    latent = w1.shape[1]
    out_dim = w2.shape[1]

    # --- Lane-dense output: pad output features up to a multiple of 128. ---
    out_pad = _round_up(out_dim, 128)
    if out_pad != out_dim:
        w2p = jnp.pad(w2, ((0, 0), (0, out_pad - out_dim)))
        b2p = jnp.pad(b2, ((0, 0), (0, out_pad - out_dim)))
    else:
        w2p, b2p = w2, b2

    # --- Batch tiling: TB rows per grid step, pad B to a multiple of TB. ---
    # TB capped at `block_batch` to keep the (TB, latent) f32 hidden
    # activation from spilling while still amortizing MXU weight pushes.
    tb = min(block_batch, _round_up(max(B, 1), 8))
    b_pad = _round_up(B, tb)
    xp = jnp.pad(x, ((0, b_pad - B), (0, 0))) if b_pad != B else x

    grid = (b_pad // tb,)
    dtype_bytes = jnp.dtype(x.dtype).itemsize
    flops = 2 * b_pad * (in_dim * latent + latent * out_pad)
    bytes_accessed = dtype_bytes * (
        b_pad * in_dim                  # x
        + in_dim * latent + latent      # w1, b1
        + latent * out_pad + out_pad    # w2, b2
        + b_pad * out_pad               # output
    )

    out = pl.pallas_call(
        fcg_single_kernel,
        out_shape=jax.ShapeDtypeStruct((b_pad, out_pad), x.dtype),
        grid_spec=pltpu.PrefetchScalarGridSpec(
            num_scalar_prefetch=0,
            grid=grid,
            in_specs=[
                # x: tiled over batch (double-buffered by Pallas).
                pl.BlockSpec((tb, in_dim), lambda i: (i, 0)),
                # Weights/biases: constant index_map -> fetched once, resident.
                pl.BlockSpec((in_dim, latent), lambda i: (0, 0)),
                pl.BlockSpec((1, latent), lambda i: (0, 0)),
                pl.BlockSpec((latent, out_pad), lambda i: (0, 0)),
                pl.BlockSpec((1, out_pad), lambda i: (0, 0)),
            ],
            out_specs=pl.BlockSpec((tb, out_pad), lambda i: (i, 0)),
        ),
        compiler_params=pltpu.CompilerParams(
            dimension_semantics=("parallel",),   # shard batch tiles across TCs
        ),
        cost_estimate=pl.CostEstimate(
            flops=flops,
            transcendentals=b_pad * latent,
            bytes_accessed=bytes_accessed,
        ),
    )(xp, w1, b1, w2p, b2p)

    # Drop batch padding and the lane-padding of the output features.
    return out[:B, :out_dim]


def init_params(key, input_dim, output_dim, latent_dim, dtype=jnp.float32):
    """Deterministic PyTorch-style (uniform +/- 1/sqrt(fan_in)) init."""
    k1, k2, k3, k4 = jax.random.split(key, 4)
    bound1 = 1.0 / (input_dim ** 0.5)
    bound2 = 1.0 / (latent_dim ** 0.5)
    w1 = jax.random.uniform(k1, (input_dim, latent_dim), dtype, -bound1, bound1)
    b1 = jax.random.uniform(k2, (1, latent_dim), dtype, -bound1, bound1)
    w2 = jax.random.uniform(k3, (latent_dim, output_dim), dtype, -bound2, bound2)
    b2 = jax.random.uniform(k4, (1, output_dim), dtype, -bound2, bound2)
    return w1, b1, w2, b2


if __name__ == "__main__":
    # Small shapes consistent with the module: FCGSingle(input_dim=32,
    # output_dim=16, latent_dim=128); batch of 8 samples.
    # NOTE: at these demo sizes the kernel is pure launch overhead; the tiling
    # / bf16 / lane-density choices pay off once B is in the hundreds+.
    batch, input_dim, latent_dim, output_dim = 8, 32, 128, 16

    key = jax.random.PRNGKey(0)
    kx, kp = jax.random.split(key)
    x = jax.random.normal(kx, (batch, input_dim), jnp.float32)
    w1, b1, w2, b2 = init_params(kp, input_dim, output_dim, latent_dim)

    out = fcg_single_forward(x, w1, b1, w2, b2)
    out = jax.block_until_ready(out)

    # Pure-JAX f32 reference (same math as the PyTorch module). Tolerance is
    # relaxed because the kernel runs bf16 MXU operands + approx reciprocal.
    ref = jax.nn.sigmoid(x @ w1 + b1) @ w2 + b2
    assert out.shape == (batch, output_dim)
    assert jnp.allclose(out, ref, atol=2e-2, rtol=2e-2), (
        float(jnp.max(jnp.abs(out - ref))))

    print("KERNEL_OK")
</pallas_src>

<mosaic_0001>
module attributes {stable_mosaic.version = 11 : i64} {
  func.func @fcg_single_kernel(%arg0: i32, %arg1: memref<8x32xf32, #tpu.memory_space<vmem>>, %arg2: memref<32x128xf32, #tpu.memory_space<vmem>>, %arg3: memref<1x128xf32, #tpu.memory_space<vmem>>, %arg4: memref<128x128xf32, #tpu.memory_space<vmem>>, %arg5: memref<1x128xf32, #tpu.memory_space<vmem>>, %arg6: memref<8x128xf32, #tpu.memory_space<vmem>>) attributes {dimension_semantics = [#tpu.dimension_semantics<parallel>], iteration_bounds = array<i64: 1>, scalar_prefetch = 0 : i64, scratch_operands = 0 : i64, tpu.core_type = #tpu.core_type<tc>, window_params = [{transform_indices = @transform_0, window_bounds = array<i64: 8, 32>}, {pipeline_mode = #tpu.pipeline_mode<synchronous>, transform_indices = @transform_1, window_bounds = array<i64: 32, 128>}, {pipeline_mode = #tpu.pipeline_mode<synchronous>, transform_indices = @transform_2, window_bounds = array<i64: 1, 128>}, {pipeline_mode = #tpu.pipeline_mode<synchronous>, transform_indices = @transform_3, window_bounds = array<i64: 128, 128>}, {pipeline_mode = #tpu.pipeline_mode<synchronous>, transform_indices = @transform_4, window_bounds = array<i64: 1, 128>}, {transform_indices = @transform_5, window_bounds = array<i64: 8, 128>}]} {
    %c0 = arith.constant 0 : index
    %c0_0 = arith.constant 0 : index
    %0 = vector.load %arg1[%c0, %c0_0] : memref<8x32xf32, #tpu.memory_space<vmem>>, vector<8x32xf32>
    %1 = arith.truncf %0 : vector<8x32xf32> to vector<8x32xbf16>
    %c0_1 = arith.constant 0 : index
    %c0_2 = arith.constant 0 : index
    %2 = vector.load %arg2[%c0_1, %c0_2] : memref<32x128xf32, #tpu.memory_space<vmem>>, vector<32x128xf32>
    %3 = arith.truncf %2 : vector<32x128xf32> to vector<32x128xbf16>
    %cst = arith.constant dense<0.000000e+00> : vector<8x128xf32>
    %4 = tpu.matmul %1, %3, %cst {dimension_numbers = #tpu.dot_dimension_numbers<[1], [0], [0], [1], [0, 0, 1, 1], [], []>} : vector<8x32xbf16>, vector<32x128xbf16>, vector<8x128xf32> -> vector<8x128xf32>
    %c0_3 = arith.constant 0 : index
    %c0_4 = arith.constant 0 : index
    %5 = vector.load %arg3[%c0_3, %c0_4] : memref<1x128xf32, #tpu.memory_space<vmem>>, vector<1x128xf32>
    %6 = vector.broadcast %5 : vector<1x128xf32> to vector<8x128xf32>
    %7 = arith.addf %4, %6 : vector<8x128xf32>
    %cst_5 = arith.constant 0.000000e+00 : f32
    %8 = vector.broadcast %cst_5 : f32 to vector<8x128xf32>
    %9 = arith.subf %8, %7 : vector<8x128xf32>
    %10 = math.exp %9 : vector<8x128xf32>
    %cst_6 = arith.constant 1.000000e+00 : f32
    %11 = vector.broadcast %cst_6 : f32 to vector<8x128xf32>
    %12 = arith.addf %11, %10 : vector<8x128xf32>
    %13 = tpu.reciprocal %12 {approx = true} : vector<8x128xf32> -> vector<8x128xf32>
    %14 = arith.truncf %13 : vector<8x128xf32> to vector<8x128xbf16>
    %c0_7 = arith.constant 0 : index
    %c0_8 = arith.constant 0 : index
    %15 = vector.load %arg4[%c0_7, %c0_8] : memref<128x128xf32, #tpu.memory_space<vmem>>, vector<128x128xf32>
    %16 = arith.truncf %15 : vector<128x128xf32> to vector<128x128xbf16>
    %cst_9 = arith.constant dense<0.000000e+00> : vector<8x128xf32>
    %17 = tpu.matmul %14, %16, %cst_9 {dimension_numbers = #tpu.dot_dimension_numbers<[1], [0], [0], [1], [0, 0, 1, 1], [], []>} : vector<8x128xbf16>, vector<128x128xbf16>, vector<8x128xf32> -> vector<8x128xf32>
    %c0_10 = arith.constant 0 : index
    %c0_11 = arith.constant 0 : index
    %18 = vector.load %arg5[%c0_10, %c0_11] : memref<1x128xf32, #tpu.memory_space<vmem>>, vector<1x128xf32>
    %19 = vector.broadcast %18 : vector<1x128xf32> to vector<8x128xf32>
    %20 = arith.addf %17, %19 : vector<8x128xf32>
    %c0_12 = arith.constant 0 : index
    %c0_13 = arith.constant 0 : index
    %21 = vector.load %arg6[%c0_12, %c0_13] : memref<8x128xf32, #tpu.memory_space<vmem>>, vector<8x128xf32>
    tpu.vector_store %arg6[%c0_12, %c0_13], %20 {strides = array<i32>} : memref<8x128xf32, #tpu.memory_space<vmem>>, vector<8x128xf32>,
    return
  }
  func.func @transform_0(%arg0: i32) -> (i32, i32) {
    %c0_i32 = arith.constant 0 : i32
    %c0_i32_0 = arith.constant 0 : i32
    return %arg0, %c0_i32 : i32, i32
  }
  func.func @transform_1(%arg0: i32) -> (i32, i32) {
    %c0_i32 = arith.constant 0 : i32
    %c0_i32_0 = arith.constant 0 : i32
    %c0_i32_1 = arith.constant 0 : i32
    return %c0_i32, %c0_i32_0 : i32, i32
  }
  func.func @transform_2(%arg0: i32) -> (i32, i32) {
    %c0_i32 = arith.constant 0 : i32
    %c0_i32_0 = arith.constant 0 : i32
    %c0_i32_1 = arith.constant 0 : i32
    return %c0_i32, %c0_i32_0 : i32, i32
  }
  func.func @transform_3(%arg0: i32) -> (i32, i32) {
    %c0_i32 = arith.constant 0 : i32
    %c0_i32_0 = arith.constant 0 : i32
    %c0_i32_1 = arith.constant 0 : i32
    return %c0_i32, %c0_i32_0 : i32, i32
  }
  func.func @transform_4(%arg0: i32) -> (i32, i32) {
    %c0_i32 = arith.constant 0 : i32
    %c0_i32_0 = arith.constant 0 : i32
    %c0_i32_1 = arith.constant 0 : i32
    return %c0_i32, %c0_i32_0 : i32, i32
  }
  func.func @transform_5(%arg0: i32) -> (i32, i32) {
    %c0_i32 = arith.constant 0 : i32
    %c0_i32_0 = arith.constant 0 : i32
    return %arg0, %c0_i32 : i32, i32
  }
}

</mosaic_0001>

<llo_original>
// kernel: tpu_custom_call.1
$region0: #{tpu_custom_call.1}
  #allocation0 [shape = 'u32[]', space=smem, size = 0x4, offset = 0x4, fixed_abs, tag = 'smem constant byte address 0x4 - core index']
  #allocation1 [shape = 'u32[144,128]{1,0:T(1,128)}', space=vmem, size = 0x12000, scoped, tag = 'internal scratch']
  %s0 = inlined_call_operand.hbm [shape: f32[8,32], index: 0, kind: input, shape index: {}]
  %s1 = inlined_call_operand.hbm [shape: f32[32,128], index: 1, kind: input, shape index: {}]
  %s2 = inlined_call_operand.vmem [shape: f32[1,128], index: 2, kind: input, shape index: {}]
  %s3 = inlined_call_operand.hbm [shape: f32[128,128], index: 3, kind: input, shape index: {}]
  %s4 = inlined_call_operand.vmem [shape: f32[1,128], index: 4, kind: input, shape index: {}]
  %s5 = inlined_call_operand.hbm [shape: f32[8,128], index: 5, kind: output, shape index: {}]
  %s6 = sld [smem:[#allocation0]]
  $region42: #{tpu_custom_call.1} parent=0
    _
  %s8 = ssub.s32 1, %s6
  %s9 = scalar_select 0, %s8, %s6
  $region1: #{tpu_custom_call.1} parent=0
    #allocation2 [shape = 'u8[4096]{0}', space=vmem, size = 0x1000, scoped, tag = 'input window, operand 0, single buffered']
    #allocation3 [shape = 's32[1]{0}', space=sflag, size = 0x4, scoped, tag = 'scoped memory for tpu_custom_call.1']
    #allocation4 [shape = 's32[1]{0}', space=sflag, size = 0x4, scoped, tag = 'scoped memory for tpu_custom_call.1']
    #allocation5 [shape = 'u8[16384]{0}', space=vmem, size = 0x4000, scoped, tag = 'input window, operand 1, single buffered']
    #allocation6 [shape = 's32[1]{0}', space=sflag, size = 0x4, scoped, tag = 'scoped memory for tpu_custom_call.1']
    #allocation7 [shape = 'u8[65536]{0}', space=vmem, size = 0x10000, scoped, tag = 'input window, operand 3, single buffered']
    #allocation8 [shape = 'u8[4096]{0}', space=vmem, size = 0x1000, scoped, tag = 'output window, operand 0, single buffered']
    %10 = vsyncpa [#allocation3], 0
    %11 = vsyncpa [#allocation6], 0
    %12 = vsyncpa [#allocation4], 0
    // Predicated region
    $region2: #{tpu_custom_call.1} parent=1 // pred_check
      _
    $region3: #{tpu_custom_call.1} parent=1 // pred_check_branch
      %14 = sbr.rel (0) target = $region5
    $region4: #{tpu_custom_call.1} parent=1 // pred_region
      %s16 = ssub.s32 128, 128
      %17 = vsyncadd [#allocation3], %s16
      %s19 = sshll.u32 [#allocation2], 4
      %s20 = int_to_ptr.vmem [resolvable:$true] %s19
      %22 = dma.hbm_to_vmem [thread:$0]  %s0, 128, %s20, [#allocation3]
    $region5: #{tpu_custom_call.1} parent=1 // pred_fallthru
      _
    // Predicated region
    $region6: #{tpu_custom_call.1} parent=1 // pred_check
      _
    $region7: #{tpu_custom_call.1} parent=1 // pred_check_branch
      %24 = sbr.rel (0) target = $region9
    $region8: #{tpu_custom_call.1} parent=1 // pred_region
      %s26 = ssub.s32 512, 512
      %27 = vsyncadd [#allocation6], %s26
      %s28 = sshll.u32 [#allocation5], 4
      %s29 = int_to_ptr.vmem [resolvable:$true] %s28
      %34 = dma.hbm_to_vmem [thread:$0]  %s1, 512, %s29, [#allocation6], 128, 128, 8
    $region9: #{tpu_custom_call.1} parent=1 // pred_fallthru
      _
    // Predicated region
    $region10: #{tpu_custom_call.1} parent=1 // pred_check
      _
    $region11: #{tpu_custom_call.1} parent=1 // pred_check_branch
      %36 = sbr.rel (0) target = $region13
    $region12: #{tpu_custom_call.1} parent=1 // pred_region
      _
    $region13: #{tpu_custom_call.1} parent=1 // pred_fallthru
      _
    // Predicated region
    $region14: #{tpu_custom_call.1} parent=1 // pred_check
      _
    $region15: #{tpu_custom_call.1} parent=1 // pred_check_branch
      %38 = sbr.rel (0) target = $region17
    $region16: #{tpu_custom_call.1} parent=1 // pred_region
      %s40 = ssub.s32 2048, 2048
      %41 = vsyncadd [#allocation6], %s40
      %s42 = sshll.u32 [#allocation7], 4
      %s43 = int_to_ptr.vmem [resolvable:$true] %s42
      %48 = dma.hbm_to_vmem [thread:$0]  %s3, 2048, %s43, [#allocation6], 128, 128, 8
    $region17: #{tpu_custom_call.1} parent=1 // pred_fallthru
      _
    // Predicated region
    $region18: #{tpu_custom_call.1} parent=1 // pred_check
      _
    $region19: #{tpu_custom_call.1} parent=1 // pred_check_branch
      %50 = sbr.rel (0) target = $region21
    $region20: #{tpu_custom_call.1} parent=1 // pred_region
      _
    $region21: #{tpu_custom_call.1} parent=1 // pred_fallthru
      _
    // Predicated region
    $region22: #{tpu_custom_call.1} parent=1 // pred_check
      _
    $region23: #{tpu_custom_call.1} parent=1 // pred_check_branch
      %52 = sbr.rel (0) target = $region25
    $region24: #{tpu_custom_call.1} parent=1 // pred_region
      %53 = dma.done [#allocation3], 128
    $region25: #{tpu_custom_call.1} parent=1 // pred_fallthru
      _
    // Predicated region
    $region26: #{tpu_custom_call.1} parent=1 // pred_check
      _
    $region27: #{tpu_custom_call.1} parent=1 // pred_check_branch
      %55 = sbr.rel (0) target = $region29
    $region28: #{tpu_custom_call.1} parent=1 // pred_region
      %56 = dma.done [#allocation6], 512
    $region29: #{tpu_custom_call.1} parent=1 // pred_fallthru
      _
    // Predicated region
    $region30: #{tpu_custom_call.1} parent=1 // pred_check
      _
    $region31: #{tpu_custom_call.1} parent=1 // pred_check_branch
      %58 = sbr.rel (0) target = $region33
    $region32: #{tpu_custom_call.1} parent=1 // pred_region
      %59 = dma.done [#allocation6], 2048
    $region33: #{tpu_custom_call.1} parent=1 // pred_fallthru
      _
    %v61 = vld [vmem:[#allocation2] sm:$0xff]
    %v62 = vpack.c.bf16 %v61, %v61
    %v63 = vld [vmem:[#allocation5] sm:$0xff]
    %v64 = vld [vmem:[#allocation5 + $0x8] sm:$0xff]
    %v65 = vld [vmem:[#allocation5 + $0x10] sm:$0xff]
    %v66 = vld [vmem:[#allocation5 + $0x18] sm:$0xff]
    %v67 = vpack.c.bf16 %v64, %v63
    %v68 = vpack.c.bf16 %v66, %v65
    %v69 = vld [vmem:[%s2] sm:$0x1]
    %v71 = vlaneseq
    %v72 = vshrl.u32 %v71, 7
    %v73 = vsub.s32 0, %v72
    %v74 = vrot.slane %v69, %v73
    %vm76 = vcmask 261120
    %v78 = vsel %vm76, %v62, 0
    %80 = vmatprep.subr.bf16.mxu0 0
    %81 = vmatpush1.bf16.msra.mxu0 %v67
    %82 = vmatprep.subr.bf16.mxu0 0
    %83 = vmatpush1.bf16.msra.mxu0 %v68
    %84 = vmatprep.subr.bf16.mxu0 0
    %85 = vmatpush1.bf16.msra.mxu0 0
    %86 = vmatprep.subr.bf16.mxu0 0
    %87 = vmatpush1.bf16.msra.mxu0 0
    %88 = vmatprep.subr.bf16.mxu0 0
    %89 = vmatpush1.bf16.msra.mxu0 0
    %90 = vmatprep.subr.bf16.mxu0 0
    %91 = vmatpush1.bf16.msra.mxu0 0
    %92 = vmatprep.subr.bf16.mxu0 0
    %93 = vmatpush1.bf16.msra.mxu0 0
    %94 = vmatprep.subr.bf16.mxu0 0
    %95 = vmatpush1.bf16.msra.mxu0 0
    %96 = vmatprep.subr.bf16.mxu0 0
    %97 = vmatpush1.bf16.msra.mxu0 0
    %98 = vmatprep.subr.bf16.mxu0 0
    %99 = vmatpush1.bf16.msra.mxu0 0
    %100 = vmatprep.subr.bf16.mxu0 0
    %101 = vmatpush1.bf16.msra.mxu0 0
    %102 = vmatprep.subr.bf16.mxu0 0
    %103 = vmatpush1.bf16.msra.mxu0 0
    %104 = vmatprep.subr.bf16.mxu0 0
    %105 = vmatpush1.bf16.msra.mxu0 0
    %106 = vmatprep.subr.bf16.mxu0 0
    %107 = vmatpush1.bf16.msra.mxu0 0
    %108 = vmatprep.subr.bf16.mxu0 0
    %109 = vmatpush1.bf16.msra.mxu0 0
    %110 = vmatprep.subr.bf16.mxu0 0
    %111 = vmatpush1.bf16.msra.mxu0 0
    %112 = vmatprep.mubr.bf16.mxu0 0
    %113 = vmatmul.mubr.bf16.gmra.mrb[0].mxu0 %v78
    %v114 = vpop.f32.mrb[0].mxu0
    %v115 = vadd.f32 %v74, %v114
    %v116 = vpop.f32.mrb[0].mxu0
    %v117 = vpop.f32.mrb[0].mxu0
    %v118 = vpop.f32.mrb[0].mxu0
    %119 = vdwg.mxu0
    %v120 = vsub.f32 0.0, %v115
    %v121 = vmul.f32 %v120, 1.442695
    %v122 = vpow.pop %v121
    %v123 = vadd.f32 %v122, 1.0
    %v124 = vrcp.pop %v123
    %v125 = vpack.c.bf16 %v124, %v124
    %v126 = vld [vmem:[#allocation7] sm:$0xff]
    %v127 = vld [vmem:[#allocation7 + $0x8] sm:$0xff]
    %v128 = vld [vmem:[#allocation7 + $0x10] sm:$0xff]
    %v129 = vld [vmem:[#allocation7 + $0x18] sm:$0xff]
    %v130 = vld [vmem:[#allocation7 + $0x20] sm:$0xff]
    %v131 = vld [vmem:[#allocation7 + $0x28] sm:$0xff]
    %v132 = vld [vmem:[#allocation7 + $0x30] sm:$0xff]
    %v133 = vld [vmem:[#allocation7 + $0x38] sm:$0xff]
    %v134 = vld [vmem:[#allocation7 + $0x40] sm:$0xff]
    %v135 = vld [vmem:[#allocation7 + $0x48] sm:$0xff]
    %v136 = vld [vmem:[#allocation7 + $0x50] sm:$0xff]
    %v137 = vld [vmem:[#allocation7 + $0x58] sm:$0xff]
    %v138 = vld [vmem:[#allocation7 + $0x60] sm:$0xff]
    %v139 = vld [vmem:[#allocation7 + $0x68] sm:$0xff]
    %v140 = vld [vmem:[#allocation7 + $0x70] sm:$0xff]
    %v141 = vld [vmem:[#allocation7 + $0x78] sm:$0xff]
    %v142 = vpack.c.bf16 %v127, %v126
    %v143 = vpack.c.bf16 %v129, %v128
    %v144 = vpack.c.bf16 %v131, %v130
    %v145 = vpack.c.bf16 %v133, %v132
    %v146 = vpack.c.bf16 %v135, %v134
    %v147 = vpack.c.bf16 %v137, %v136
    %v148 = vpack.c.bf16 %v139, %v138
    %v149 = vpack.c.bf16 %v141, %v140
    %v150 = vld [vmem:[%s4] sm:$0x1]
    %v152 = vlaneseq
    %v153 = vshrl.u32 %v152, 7
    %v154 = vsub.s32 0, %v153
    %v155 = vrot.slane %v150, %v154
    %157 = vmatprep.subr.bf16.mxu0 0
    %158 = vmatpush1.bf16.msra.mxu0 %v142
    %159 = vmatprep.subr.bf16.mxu0 0
    %160 = vmatpush1.bf16.msra.mxu0 %v143
    %161 = vmatprep.subr.bf16.mxu0 0
    %162 = vmatpush1.bf16.msra.mxu0 %v144
    %163 = vmatprep.subr.bf16.mxu0 0
    %164 = vmatpush1.bf16.msra.mxu0 %v145
    %165 = vmatprep.subr.bf16.mxu0 0
    %166 = vmatpush1.bf16.msra.mxu0 %v146
    %167 = vmatprep.subr.bf16.mxu0 0
    %168 = vmatpush1.bf16.msra.mxu0 %v147
    %169 = vmatprep.subr.bf16.mxu0 0
    %170 = vmatpush1.bf16.msra.mxu0 %v148
    %171 = vmatprep.subr.bf16.mxu0 0
    %172 = vmatpush1.bf16.msra.mxu0 %v149
    %173 = vmatprep.subr.bf16.mxu0 0
    %174 = vmatpush1.bf16.msra.mxu0 0
    %175 = vmatprep.subr.bf16.mxu0 0
    %176 = vmatpush1.bf16.msra.mxu0 0
    %177 = vmatprep.subr.bf16.mxu0 0
    %178 = vmatpush1.bf16.msra.mxu0 0
    %179 = vmatprep.subr.bf16.mxu0 0
    %180 = vmatpush1.bf16.msra.mxu0 0
    %181 = vmatprep.subr.bf16.mxu0 0
    %182 = vmatpush1.bf16.msra.mxu0 0
    %183 = vmatprep.subr.bf16.mxu0 0
    %184 = vmatpush1.bf16.msra.mxu0 0
    %185 = vmatprep.subr.bf16.mxu0 0
    %186 = vmatpush1.bf16.msra.mxu0 0
    %187 = vmatprep.subr.bf16.mxu0 0
    %188 = vmatpush1.bf16.msra.mxu0 0
    %189 = vmatprep.mubr.bf16.mxu0 0
    %190 = vmatmul.mubr.bf16.gmra.mrb[0].mxu0 %v125
    %v191 = vpop.f32.mrb[0].mxu0
    %v192 = vadd.f32 %v155, %v191
    %v193 = vpop.f32.mrb[0].mxu0
    %v194 = vpop.f32.mrb[0].mxu0
    %v195 = vpop.f32.mrb[0].mxu0
    %196 = vdwg.mxu0
    %197 = vst [vmem:[#allocation8] sm:$0xff] %v192
    // Predicated region
    $region34: #{tpu_custom_call.1} parent=1 // pred_check
      _
    $region35: #{tpu_custom_call.1} parent=1 // pred_check_branch
      %199 = sbr.rel (0) target = $region37
    $region36: #{tpu_custom_call.1} parent=1 // pred_region
      %s201 = ssub.s32 128, 128
      %202 = vsyncadd [#allocation4], %s201
      %s204 = sshll.u32 [#allocation8], 4
      %s205 = int_to_ptr.vmem [resolvable:$true] %s204
      %207 = dma.vmem_to_hbm [thread:$0]  %s205, 128, %s5, [#allocation4]
    $region37: #{tpu_custom_call.1} parent=1 // pred_fallthru
      _
    // Predicated region
    $region38: #{tpu_custom_call.1} parent=1 // pred_check
      _
    $region39: #{tpu_custom_call.1} parent=1 // pred_check_branch
      %209 = sbr.rel (0) target = $region41
    $region40: #{tpu_custom_call.1} parent=1 // pred_region
      %210 = dma.done [#allocation4], 128
    $region41: #{tpu_custom_call.1} parent=1 // pred_fallthru
      _
    %211 = vsyncpa [#allocation3], 1
    %212 = vsyncpa [#allocation6], 1
    %213 = vsyncpa [#allocation4], 1

</llo_original>
